<compile_context>
chip_gen: v7x
topology: tpu7x:2x2x1
jax: 0.10.0
libtpu: 0.0.40
codegen_flags: <defaults>
</compile_context>

<pallas_src>
import math
from functools import partial

import jax
import jax.numpy as jnp
from jax import lax
from jax.experimental import pallas as pl
from jax.experimental.pallas import tpu as pltpu


def _round_up(v, m):
    return ((v + m - 1) // m) * m


def _gather_kernel(starts_ref, idx_ref, x_ref, out_ref, *, kpad, win):
    """Accumulate x[perm] into the resident (kpad, c_tile) output block.

    grid = (num_feature_blocks [parallel], num_node_blocks [arbitrary / reduction]).
      starts_ref: SMEM (nb,) int32  -- #selected nodes before this node block
                  (window start for the windowed accumulation).
      idx_ref   : (1, bn) int32     -- output slot of each node in this block, -1 if dropped.
      x_ref     : (bn, c_tile)      -- feature block, native dtype.
      out_ref   : (kpad, c_tile)    -- resident accumulator (one block per feature tile).
    """
    b = pl.program_id(1)

    @pl.when(b == 0)
    def _init():
        out_ref[...] = jnp.zeros_like(out_ref)

    idx_row = idx_ref[...]                                     # (1, bn)

    if win == kpad:
        # K is small: accumulate over the full output width.
        off = 0
    else:
        # Kept nodes of this block land in <= bn consecutive output rows; round the
        # start down to the 8-sublane grid and clamp so the window stays in bounds.
        start = starts_ref[b]
        off = jnp.minimum((start // 8) * 8, kpad - win)
        off = pl.multiple_of(off, 8)

    # One-hot selection: row s of the window picks the node whose new index is off+s.
    # Dropped / padded nodes carry -1 and never match (slot >= 0).
    slot = lax.broadcasted_iota(jnp.int32, (win, 1), 0) + off   # (win, 1)
    sel = (slot == idx_row).astype(x_ref.dtype)                 # (win, bn) one-hot
    contrib = jnp.dot(sel, x_ref[...], preferred_element_type=jnp.float32)
    out_ref[pl.ds(off, win), :] += contrib.astype(out_ref.dtype)


def random_selection(x, edge_index, edge_attr=None, batch=None, *, ratio=0.5,
                     key=None, node_block=128):
    """JAX/Pallas equivalent of RandomSelection.forward (batch=None path)."""
    N, C = x.shape
    if key is None:
        key = jax.random.PRNGKey(0)
    if batch is None:
        batch = jnp.zeros((N,), jnp.int32)
    # TODO(synk): only the single-graph path (batch == all zeros) is implemented; the
    # torch module's per-graph selection for multi-graph batches is not translated.

    K = int(math.ceil(N * float(ratio)))
    K = max(1, min(K, N))

    if x.dtype == jnp.bfloat16 or x.dtype == jnp.float32:
        work_dtype = x.dtype                    # bf16 inputs take the fast MXU path
    else:
        work_dtype = jnp.float32

    # ---- random K-subset (== sort(randperm(N)[:K])) and its inverse map, O(N) in XLA ----
    keys = jax.random.permutation(key, N)                  # distinct integer keys 0..N-1
    keep = keys < K                                        # uniform random K-subset
    keep_i = keep.astype(jnp.int32)
    new_idx = jnp.cumsum(keep_i) - keep_i                  # exclusive prefix = slot in perm
    new_idx = jnp.where(keep, new_idx, -1)                 # -1 marks dropped nodes
    perm = jnp.nonzero(keep, size=K, fill_value=0)[0].astype(jnp.int32)  # ascending

    # ---- padded, lane/sublane-aligned kernel inputs ----
    bn = max(128, (int(node_block) // 128) * 128)          # node block (sublanes of x)
    npad = _round_up(N, bn)
    nb = npad // bn
    cpad = _round_up(max(C, 1), 128)
    c_tile = min(256, cpad)
    cpad = _round_up(cpad, c_tile)
    nc = cpad // c_tile
    kpad = _round_up(K, 8)                                 # sublane-pad the output rows
    win = kpad if kpad <= bn + 8 else bn + 8               # windowed accumulation width

    x_pad = jnp.pad(x.astype(work_dtype), ((0, npad - N), (0, cpad - C)))
    idx_row = jnp.pad(new_idx, (0, npad - N), constant_values=-1).reshape(1, npad)
    blk_cnt = jnp.pad(keep_i, (0, npad - N)).reshape(nb, bn).sum(axis=1)
    starts = (jnp.cumsum(blk_cnt) - blk_cnt).astype(jnp.int32)  # kept nodes before block b

    out = pl.pallas_call(
        partial(_gather_kernel, kpad=kpad, win=win),
        grid_spec=pltpu.PrefetchScalarGridSpec(
            num_scalar_prefetch=1,                         # 'starts' lands in SMEM
            grid=(nc, nb),
            in_specs=[
                pl.BlockSpec((1, bn), lambda c, b, starts: (0, b)),       # new-slot ids
                pl.BlockSpec((bn, c_tile), lambda c, b, starts: (b, c)),  # features
            ],
            out_specs=pl.BlockSpec((kpad, c_tile), lambda c, b, starts: (0, c)),
        ),
        out_shape=jax.ShapeDtypeStruct((kpad, cpad), work_dtype),
        compiler_params=pltpu.CompilerParams(
            dimension_semantics=("parallel", "arbitrary"),
            vmem_limit_bytes=48 * 1024 * 1024),
    )(starts, idx_row, x_pad)

    x_out = out[:K, :C].astype(x.dtype)                    # == x[perm]

    # ---- filter_adj: O(E) gather/remap in the wrapper ----
    row = edge_index[0].astype(jnp.int32)
    col = edge_index[1].astype(jnp.int32)
    nrow = jnp.take(new_idx, row)
    ncol = jnp.take(new_idx, col)
    keep_e = (nrow >= 0) & (ncol >= 0)

    # TODO(synk): torch returns edge_index with a data-dependent number of columns; with
    # static shapes the kept edges are compacted to the front, padded with -1, and the
    # true count is returned alongside.
    order = jnp.argsort(jnp.logical_not(keep_e), stable=True)
    keep_s = keep_e[order]
    nrow_c = jnp.where(keep_s, nrow[order], -1)
    ncol_c = jnp.where(keep_s, ncol[order], -1)
    edge_index_out = jnp.stack([nrow_c, ncol_c], axis=0)
    num_kept = jnp.sum(keep_e.astype(jnp.int32))
    if edge_attr is not None:
        mask = keep_s.reshape((-1,) + (1,) * (edge_attr.ndim - 1))
        edge_attr = jnp.where(mask, edge_attr[order], 0)

    batch_out = jnp.take(batch, perm)

    # mirrors the torch module's 6-tuple (x returned twice), plus the valid-edge count
    return (x_out, edge_index_out, edge_attr, batch_out, perm, x_out), num_kept


if __name__ == "__main__":
    root = jax.random.PRNGKey(0)
    kx, ke, ks, kx2, ke2, ks2 = jax.random.split(root, 6)

    # case 1: tiny single graph matching the module (in_channels = 1)
    N, C, E = 16, 1, 24
    x = jax.random.normal(kx, (N, C), jnp.float32)
    edge_index = jax.random.randint(ke, (2, E), 0, N, dtype=jnp.int32)

    (x_out, ei_out, ea_out, batch_out, perm, x_dup), num_kept = random_selection(
        x, edge_index, edge_attr=None, batch=None, ratio=0.5, key=ks)
    jax.block_until_ready((x_out, ei_out, batch_out, perm, num_kept))

    K = 8
    assert perm.shape == (K,)
    assert bool(jnp.all((perm >= 0) & (perm < N)))
    assert bool(jnp.all(perm[1:] > perm[:-1]))                 # ascending, no repeats
    assert bool(jnp.allclose(x_out, x[perm], rtol=1e-5, atol=1e-5))
    assert bool(jnp.all(batch_out == 0))
    mask_e = jnp.isin(edge_index[0], perm) & jnp.isin(edge_index[1], perm)
    nk = int(num_kept)
    assert nk == int(jnp.sum(mask_e))
    if nk > 0:
        assert bool(jnp.all(jnp.take(perm, ei_out[0, :nk]) == edge_index[0][mask_e]))
        assert bool(jnp.all(jnp.take(perm, ei_out[1, :nk]) == edge_index[1][mask_e]))

    # case 2: exercises the windowed accumulation, multiple node blocks and feature blocks
    N2, C2, E2 = 512, 300, 1000
    x2 = jax.random.normal(kx2, (N2, C2), jnp.float32)
    edge_index2 = jax.random.randint(ke2, (2, E2), 0, N2, dtype=jnp.int32)
    (x_out2, ei_out2, _, batch_out2, perm2, _), num_kept2 = random_selection(
        x2, edge_index2, edge_attr=None, batch=None, ratio=0.5, key=ks2)
    jax.block_until_ready((x_out2, perm2, num_kept2))
    assert perm2.shape == (256,)
    assert bool(jnp.all(perm2[1:] > perm2[:-1]))
    assert bool(jnp.allclose(x_out2, x2[perm2], rtol=1e-4, atol=1e-5))

    print("KERNEL_OK")
</pallas_src>

<mosaic_0001>
module attributes {stable_mosaic.version = 11 : i64} {
  func.func @_gather_kernel(%arg0: i32, %arg1: i32, %arg2: memref<1xi32, #tpu.memory_space<smem>>, %arg3: memref<1x128xi32, #tpu.memory_space<vmem>>, %arg4: memref<128x128xf32, #tpu.memory_space<vmem>>, %arg5: memref<8x128xf32, #tpu.memory_space<vmem>>) attributes {dimension_semantics = [#tpu.dimension_semantics<parallel>, #tpu.dimension_semantics<arbitrary>], iteration_bounds = array<i64: 1, 1>, scalar_prefetch = 1 : i64, scratch_operands = 0 : i64, tpu.core_type = #tpu.core_type<tc>, window_params = [{transform_indices = @transform_0, window_bounds = array<i64: 1, 128>}, {transform_indices = @transform_1, window_bounds = array<i64: 128, 128>}, {transform_indices = @transform_2, window_bounds = array<i64: 8, 128>}]} {
    %c0_i32 = arith.constant 0 : i32
    %0 = arith.cmpi eq, %arg1, %c0_i32 : i32
    %1 = arith.extui %0 : i1 to i32
    %c0_i32_0 = arith.constant 0 : i32
    %2 = arith.cmpi ne, %1, %c0_i32_0 : i32
    scf.if %2 {
      %cst_9 = arith.constant 0.000000e+00 : f32
      %17 = vector.broadcast %cst_9 : f32 to vector<8x128xf32>
      %c0_10 = arith.constant 0 : index
      %c0_11 = arith.constant 0 : index
      %18 = vector.load %arg5[%c0_10, %c0_11] : memref<8x128xf32, #tpu.memory_space<vmem>>, vector<8x128xf32>
      tpu.vector_store %arg5[%c0_10, %c0_11], %17 {strides = array<i32>} : memref<8x128xf32, #tpu.memory_space<vmem>>, vector<8x128xf32>,
    } else {
    }
    %c0 = arith.constant 0 : index
    %c0_1 = arith.constant 0 : index
    %3 = vector.load %arg3[%c0, %c0_1] : memref<1x128xi32, #tpu.memory_space<vmem>>, vector<1x128xi32>
    %4 = tpu.iota {dimensions = array<i32: 0>} : vector<8x1xi32>
    %c0_i32_2 = arith.constant 0 : i32
    %5 = vector.broadcast %c0_i32_2 : i32 to vector<8x1xi32>
    %6 = arith.addi %4, %5 : vector<8x1xi32>
    %7 = vector.broadcast %6 : vector<8x1xi32> to vector<8x128xi32>
    %8 = vector.broadcast %3 : vector<1x128xi32> to vector<8x128xi32>
    %9 = arith.cmpi eq, %7, %8 : vector<8x128xi32>
    %10 = arith.extui %9 : vector<8x128xi1> to vector<8x128xi32>
    %11 = arith.sitofp %10 : vector<8x128xi32> to vector<8x128xf32>
    %c0_3 = arith.constant 0 : index
    %c0_4 = arith.constant 0 : index
    %12 = vector.load %arg4[%c0_3, %c0_4] : memref<128x128xf32, #tpu.memory_space<vmem>>, vector<128x128xf32>
    %cst = arith.constant dense<0.000000e+00> : vector<8x128xf32>
    %13 = tpu.matmul %11, %12, %cst {dimension_numbers = #tpu.dot_dimension_numbers<[1], [0], [0], [1], [0, 0, 1, 1], [], []>} : vector<8x128xf32>, vector<128x128xf32>, vector<8x128xf32> -> vector<8x128xf32>
    %c0_5 = arith.constant 0 : index
    %c0_6 = arith.constant 0 : index
    %14 = vector.load %arg5[%c0_5, %c0_6] : memref<8x128xf32, #tpu.memory_space<vmem>>, vector<8x128xf32>
    %15 = arith.addf %14, %13 : vector<8x128xf32>
    %c0_7 = arith.constant 0 : index
    %c0_8 = arith.constant 0 : index
    %16 = vector.load %arg5[%c0_7, %c0_8] : memref<8x128xf32, #tpu.memory_space<vmem>>, vector<8x128xf32>
    tpu.vector_store %arg5[%c0_7, %c0_8], %15 {strides = array<i32>} : memref<8x128xf32, #tpu.memory_space<vmem>>, vector<8x128xf32>,
    return
  }
  func.func @transform_0(%arg0: i32, %arg1: i32, %arg2: memref<1xi32, #tpu.memory_space<smem>>) -> (i32, i32) {
    %c0_i32 = arith.constant 0 : i32
    %c0_i32_0 = arith.constant 0 : i32
    return %c0_i32, %arg1 : i32, i32
  }
  func.func @transform_1(%arg0: i32, %arg1: i32, %arg2: memref<1xi32, #tpu.memory_space<smem>>) -> (i32, i32) {
    %c0_i32 = arith.constant 0 : i32
    return %arg1, %arg0 : i32, i32
  }
  func.func @transform_2(%arg0: i32, %arg1: i32, %arg2: memref<1xi32, #tpu.memory_space<smem>>) -> (i32, i32) {
    %c0_i32 = arith.constant 0 : i32
    %c0_i32_0 = arith.constant 0 : i32
    return %c0_i32, %arg0 : i32, i32
  }
}

</mosaic_0001>

<llo_original>
// kernel: tpu_custom_call.1
$region0: #{tpu_custom_call.1}
  #allocation0 [shape = 'u32[]', space=smem, size = 0x4, offset = 0x4, fixed_abs, tag = 'smem constant byte address 0x4 - core index']
  #allocation1 [shape = 'u32[144,128]{1,0:T(1,128)}', space=vmem, size = 0x12000, scoped, tag = 'internal scratch']
  #allocation2 [shape = 's32[1]{0}', space=sflag, size = 0x4, scoped, tag = 'scoped memory for tpu_custom_call.1']
  #allocation3 [shape = 's32[1]{0:T(128)S(6)}', space=smem, size = 0x200, scoped, tag = 'prefetched SMEM operand 0']
  %s0 = inlined_call_operand.<no memory space> [shape: s32[1], index: 0, kind: input, shape index: {}]
  %s1 = inlined_call_operand.vmem [shape: s32[1,128], index: 1, kind: input, shape index: {}]
  %s2 = inlined_call_operand.hbm [shape: f32[128,128], index: 2, kind: input, shape index: {}]
  %s3 = inlined_call_operand.hbm [shape: f32[8,128], index: 3, kind: output, shape index: {}]
  %s4 = sld [smem:[#allocation0]]
  $region26: #{tpu_custom_call.1} parent=0
    _
  %s6 = ssub.s32 1, %s4
  %s7 = scalar_select 0, %s6, %s4
  %8 = sst [smem:[#allocation3]] %s0
  $region1: #{tpu_custom_call.1} parent=0
    #allocation4 [shape = 'u8[65536]{0}', space=vmem, size = 0x10000, scoped, tag = 'input window, operand 2, single buffered']
    #allocation5 [shape = 's32[1]{0}', space=sflag, size = 0x4, scoped, tag = 'scoped memory for tpu_custom_call.1']
    #allocation6 [shape = 's32[1]{0}', space=sflag, size = 0x4, scoped, tag = 'scoped memory for tpu_custom_call.1']
    #allocation7 [shape = 'u8[4096]{0}', space=vmem, size = 0x1000, scoped, tag = 'output window, operand 0, single buffered']
    %9 = vsyncpa [#allocation5], 0
    %10 = vsyncpa [#allocation6], 0
    // Predicated region
    $region2: #{tpu_custom_call.1} parent=1 // pred_check
      _
    $region3: #{tpu_custom_call.1} parent=1 // pred_check_branch
      %12 = sbr.rel (0) target = $region5
    $region4: #{tpu_custom_call.1} parent=1 // pred_region
      _
    $region5: #{tpu_custom_call.1} parent=1 // pred_fallthru
      _
    // Predicated region
    $region6: #{tpu_custom_call.1} parent=1 // pred_check
      _
    $region7: #{tpu_custom_call.1} parent=1 // pred_check_branch
      %14 = sbr.rel (0) target = $region9
    $region8: #{tpu_custom_call.1} parent=1 // pred_region
      %s16 = ssub.s32 2048, 2048
      %17 = vsyncadd [#allocation5], %s16
      %s18 = sshll.u32 [#allocation4], 4
      %s19 = int_to_ptr.vmem [resolvable:$true] %s18
      %24 = dma.hbm_to_vmem [thread:$0]  %s2, 2048, %s19, [#allocation5], 128, 128, 8
    $region9: #{tpu_custom_call.1} parent=1 // pred_fallthru
      _
    // Predicated region
    $region10: #{tpu_custom_call.1} parent=1 // pred_check
      _
    $region11: #{tpu_custom_call.1} parent=1 // pred_check_branch
      %26 = sbr.rel (0) target = $region13
    $region12: #{tpu_custom_call.1} parent=1 // pred_region
      %27 = dma.done [#allocation5], 2048
    $region13: #{tpu_custom_call.1} parent=1 // pred_fallthru
      _
    %p28 = scmp.eq.s32.totalorder 0, 0
    // Predicated region
    $region14: #{tpu_custom_call.1} parent=1 // pred_check
      %p29 = pneg %p28
    $region15: #{tpu_custom_call.1} parent=1 // pred_check_branch
      %31 = sbr.rel (%p29) target = $region17
    $region16: #{tpu_custom_call.1} parent=1 // pred_region
      %32 = vst [vmem:[#allocation7] sm:$0xff] 0.0
    $region17: #{tpu_custom_call.1} parent=1 // pred_fallthru
      _
    %v33 = vld [vmem:[%s1] sm:$0x1]
    %v34 = vlaneseq
    %v35 = vshrl.u32 %v34, 7
    %v36 = vlaneseq
    %v37 = vshrl.u32 %v36, 7
    %v38 = vsub.s32 0, %v37
    %v39 = vrot.slane %v33, %v38
    %vm40 = vcmp.eq.s32.totalorder %v35, %v39
    %v41 = vsel %vm40, 1, 0
    %v42 = vcvt.s32.f32 %v41
    %v43 = vld [vmem:[#allocation4] sm:$0xff]
    %v44 = vld [vmem:[#allocation4 + $0x8] sm:$0xff]
    %v45 = vld [vmem:[#allocation4 + $0x10] sm:$0xff]
    %v46 = vld [vmem:[#allocation4 + $0x18] sm:$0xff]
    %v47 = vld [vmem:[#allocation4 + $0x20] sm:$0xff]
    %v48 = vld [vmem:[#allocation4 + $0x28] sm:$0xff]
    %v49 = vld [vmem:[#allocation4 + $0x30] sm:$0xff]
    %v50 = vld [vmem:[#allocation4 + $0x38] sm:$0xff]
    %v51 = vld [vmem:[#allocation4 + $0x40] sm:$0xff]
    %v52 = vld [vmem:[#allocation4 + $0x48] sm:$0xff]
    %v53 = vld [vmem:[#allocation4 + $0x50] sm:$0xff]
    %v54 = vld [vmem:[#allocation4 + $0x58] sm:$0xff]
    %v55 = vld [vmem:[#allocation4 + $0x60] sm:$0xff]
    %v56 = vld [vmem:[#allocation4 + $0x68] sm:$0xff]
    %v57 = vld [vmem:[#allocation4 + $0x70] sm:$0xff]
    %v58 = vld [vmem:[#allocation4 + $0x78] sm:$0xff]
    %59 = vmatprep.subr.mxu0 0.0
    %60 = vmatpush1.msra.mxu0 %v43
    %61 = vmatprep.subr.mxu0 0.0
    %62 = vmatpush1.msra.mxu0 %v44
    %63 = vmatprep.subr.mxu0 0.0
    %64 = vmatpush1.msra.mxu0 %v45
    %65 = vmatprep.subr.mxu0 0.0
    %66 = vmatpush1.msra.mxu0 %v46
    %67 = vmatprep.subr.mxu0 0.0
    %68 = vmatpush1.msra.mxu0 %v47
    %69 = vmatprep.subr.mxu0 0.0
    %70 = vmatpush1.msra.mxu0 %v48
    %71 = vmatprep.subr.mxu0 0.0
    %72 = vmatpush1.msra.mxu0 %v49
    %73 = vmatprep.subr.mxu0 0.0
    %74 = vmatpush1.msra.mxu0 %v50
    %75 = vmatprep.subr.mxu0 0.0
    %76 = vmatpush1.msra.mxu0 %v51
    %77 = vmatprep.subr.mxu0 0.0
    %78 = vmatpush1.msra.mxu0 %v52
    %79 = vmatprep.subr.mxu0 0.0
    %80 = vmatpush1.msra.mxu0 %v53
    %81 = vmatprep.subr.mxu0 0.0
    %82 = vmatpush1.msra.mxu0 %v54
    %83 = vmatprep.subr.mxu0 0.0
    %84 = vmatpush1.msra.mxu0 %v55
    %85 = vmatprep.subr.mxu0 0.0
    %86 = vmatpush1.msra.mxu0 %v56
    %87 = vmatprep.subr.mxu0 0.0
    %88 = vmatpush1.msra.mxu0 %v57
    %89 = vmatprep.subr.mxu0 0.0
    %90 = vmatpush1.msra.mxu0 %v58
    %91 = vmatprep.subr.mxu0 0.0
    %92 = vmatpush1.msra.mxu0 0.0
    %93 = vmatprep.subr.mxu0 0.0
    %94 = vmatpush1.msra.mxu0 0.0
    %95 = vmatprep.subr.mxu0 0.0
    %96 = vmatpush1.msra.mxu0 0.0
    %97 = vmatprep.subr.mxu0 0.0
    %98 = vmatpush1.msra.mxu0 0.0
    %99 = vmatprep.subr.mxu0 0.0
    %100 = vmatpush1.msra.mxu0 0.0
    %101 = vmatprep.subr.mxu0 0.0
    %102 = vmatpush1.msra.mxu0 0.0
    %103 = vmatprep.subr.mxu0 0.0
    %104 = vmatpush1.msra.mxu0 0.0
    %105 = vmatprep.subr.mxu0 0.0
    %106 = vmatpush1.msra.mxu0 0.0
    %107 = vmatprep.subr.mxu0 0.0
    %108 = vmatpush1.msra.mxu0 0.0
    %109 = vmatprep.subr.mxu0 0.0
    %110 = vmatpush1.msra.mxu0 0.0
    %111 = vmatprep.subr.mxu0 0.0
    %112 = vmatpush1.msra.mxu0 0.0
    %113 = vmatprep.subr.mxu0 0.0
    %114 = vmatpush1.msra.mxu0 0.0
    %115 = vmatprep.subr.mxu0 0.0
    %116 = vmatpush1.msra.mxu0 0.0
    %117 = vmatprep.subr.mxu0 0.0
    %118 = vmatpush1.msra.mxu0 0.0
    %119 = vmatprep.subr.mxu0 0.0
    %120 = vmatpush1.msra.mxu0 0.0
    %121 = vmatprep.subr.mxu0 0.0
    %122 = vmatpush1.msra.mxu0 0.0
    %123 = vmatprep.mubr.f32.mxu0 0.0
    %124 = vmatmul.mubr.f32.gmra.mrb[0].mxu0 %v42
    %v125 = vpop.f32.mrb[0].mxu0
    %v126 = vadd.f32 0.0, %v125
    %v127 = vpop.f32.mrb[0].mxu0
    %128 = vdwg.mxu0
    %v129 = vld [vmem:[#allocation7] sm:$0xff]
    %v130 = vadd.f32 %v129, %v126
    %131 = vst [vmem:[#allocation7] sm:$0xff] %v130
    // Predicated region
    $region18: #{tpu_custom_call.1} parent=1 // pred_check
      _
    $region19: #{tpu_custom_call.1} parent=1 // pred_check_branch
      %133 = sbr.rel (0) target = $region21
    $region20: #{tpu_custom_call.1} parent=1 // pred_region
      %s135 = ssub.s32 128, 128
      %136 = vsyncadd [#allocation6], %s135
      %s138 = sshll.u32 [#allocation7], 4
      %s139 = int_to_ptr.vmem [resolvable:$true] %s138
      %141 = dma.vmem_to_hbm [thread:$0]  %s139, 128, %s3, [#allocation6]
    $region21: #{tpu_custom_call.1} parent=1 // pred_fallthru
      _
    // Predicated region
    $region22: #{tpu_custom_call.1} parent=1 // pred_check
      _
    $region23: #{tpu_custom_call.1} parent=1 // pred_check_branch
      %143 = sbr.rel (0) target = $region25
    $region24: #{tpu_custom_call.1} parent=1 // pred_region
      %144 = dma.done [#allocation6], 128
    $region25: #{tpu_custom_call.1} parent=1 // pred_fallthru
      _
    %145 = vsyncpa [#allocation5], 1
    %146 = vsyncpa [#allocation6], 1

</llo_original>
